<compile_context>
chip_gen: v7x
topology: tpu7x:2x2x1
jax: 0.10.0
libtpu: 0.0.40
codegen_flags: <defaults>
</compile_context>

<pallas_src>
import functools
import math

import jax
import jax.numpy as jnp
from jax.experimental import pallas as pl
from jax.experimental.pallas import tpu as pltpu


LANE_CANDIDATES = (1024, 512, 256, 128)   # lane-dense last dims (multiples of 128)
PAD_LANE_WIDTH = 1024                     # lane width used on the misaligned path
ELEMS_PER_TILE = 1 << 20                  # ~4 MiB f32 working set per grid step


# --------------------------------------------------------------------------- #
# Kernels
# --------------------------------------------------------------------------- #
def _softplus_f32(t):
    # numerically stable softplus in f32: max(t,0) + log1p(exp(-|t|))
    return jnp.maximum(t, 0.0) + jnp.log1p(jnp.exp(-jnp.abs(t)))


def _softclip_kernel_fused(x_ref, o_ref, *, min_val, max_val, k_const):
    # 3 EUP transcendentals per element (exp + 2x log1p) instead of 4:
    #   softplus(max - (min + softplus(x - min)))
    #     = log1p(u + K*w) - log1p(u)
    #   with u = exp(-|x - min|), w = exp(-max(x - min, 0)), K = exp(max - min).
    x = x_ref[...].astype(jnp.float32)
    t1 = x - min_val
    u = jnp.exp(-jnp.abs(t1))                   # EUP #1
    lp_u = jnp.log1p(u)                         # EUP #2
    w = jnp.where(t1 >= 0.0, u, 1.0)            # exp(-max(t1, 0)), VPU only
    sp2 = jnp.log1p(u + k_const * w) - lp_u     # EUP #3
    o_ref[...] = (max_val - sp2).astype(o_ref.dtype)


def _softclip_kernel_plain(x_ref, o_ref, *, min_val, max_val):
    # Fallback (exact two-softplus form) for very large (max - min) where
    # exp(max - min) would overflow f32.
    x = x_ref[...].astype(jnp.float32)
    r = min_val + _softplus_f32(x - min_val)
    o_ref[...] = (max_val - _softplus_f32(max_val - r)).astype(o_ref.dtype)


# --------------------------------------------------------------------------- #
# Wrapper helpers
# --------------------------------------------------------------------------- #
def _pick_lane_width(total):
    for c in LANE_CANDIDATES:
        if total % c == 0:
            return c
    return None


def _tile_rows(R, C):
    # ~1M elements per tile (4 MiB f32 working set), rows a multiple of 8.
    tr = max(8, (ELEMS_PER_TILE // C) // 8 * 8)
    if R <= tr:
        return R            # single full-extent block (no (8,128) issue)
    return tr


@functools.lru_cache(maxsize=None)
def _vmem_cap_bytes():
    try:
        cap = int(pltpu.get_tpu_info().vmem_capacity_bytes)
    except Exception:
        cap = 64 << 20      # conservative (v7x physical VMEM)
    return (cap * 3) // 4   # leave ~25% headroom


@functools.lru_cache(maxsize=None)
def _build_softclip_call(R, C, TR, dtype, min_val, max_val):
    span = max_val - min_val
    if span <= 60.0:        # exp(span) safely representable in f32
        kernel = functools.partial(
            _softclip_kernel_fused,
            min_val=min_val, max_val=max_val, k_const=float(math.exp(span)))
    else:
        kernel = functools.partial(
            _softclip_kernel_plain, min_val=min_val, max_val=max_val)

    grid = (pl.cdiv(R, TR),)

    # Budget: 2x double-buffered in + out tiles plus a few f32 whole-tile
    # temporaries inside the kernel body.
    tile_f32_bytes = TR * C * 4
    vmem_limit = int(min(_vmem_cap_bytes(), max(16 << 20, 8 * tile_f32_bytes)))

    return pl.pallas_call(
        kernel,
        out_shape=jax.ShapeDtypeStruct((R, C), dtype),
        grid_spec=pltpu.PrefetchScalarGridSpec(
            num_scalar_prefetch=0,
            grid=grid,
            in_specs=[pl.BlockSpec((TR, C), lambda i: (i, 0))],
            out_specs=pl.BlockSpec((TR, C), lambda i: (i, 0)),
        ),
        compiler_params=pltpu.CompilerParams(
            dimension_semantics=("parallel",),
            vmem_limit_bytes=vmem_limit,
        ),
    )


def softclip_pallas(x, min_val=-6.0, max_val=6.0):
    orig_shape = x.shape
    total = int(x.size)
    if total == 0:
        return x

    min_val = float(min_val)
    max_val = float(max_val)

    # ---- aligned fast path: free reshape, no pad, no trailing slice ---------
    C = _pick_lane_width(total)
    if C is not None:
        R = total // C
        TR = _tile_rows(R, C)
        call = _build_softclip_call(R, C, TR, x.dtype, min_val, max_val)
        return call(x.reshape(R, C)).reshape(orig_shape)

    # ---- misaligned path: pad only to one lane-width multiple ---------------
    C = PAD_LANE_WIDTH
    R = pl.cdiv(total, C)
    padded = R * C
    flat = jnp.pad(x.reshape(-1), (0, padded - total))
    TR = _tile_rows(R, C)
    call = _build_softclip_call(R, C, TR, x.dtype, min_val, max_val)
    out = call(flat.reshape(R, C))
    return out.reshape(-1)[:total].reshape(orig_shape)


# --------------------------------------------------------------------------- #
# Pure-JAX reference
# --------------------------------------------------------------------------- #
def softclip_ref(x, min_val=-6.0, max_val=6.0):
    xf = x.astype(jnp.float32)
    r = min_val + jax.nn.softplus(xf - min_val)
    r = max_val - jax.nn.softplus(max_val - r)
    return r.astype(x.dtype)


if __name__ == "__main__":
    key = jax.random.PRNGKey(0)
    k1, k2, k3, k4 = jax.random.split(key, 4)

    # Primary: small NCHW input (aligned fast path, single block).
    x = jax.random.normal(k1, (2, 4, 16, 16), dtype=jnp.float32) * 10.0
    out = jax.block_until_ready(softclip_pallas(x, min_val=-6.0, max_val=6.0))
    ref = softclip_ref(x, min_val=-6.0, max_val=6.0)
    assert out.shape == x.shape and out.dtype == x.dtype
    assert jnp.allclose(out, ref, atol=1e-5, rtol=1e-5), "mismatch vs reference"

    # Aligned multi-tile path with a ragged final block (grid > 1, no pad/slice).
    x_big = jax.random.normal(k2, (1200, 1024), dtype=jnp.float32) * 10.0
    out_big = jax.block_until_ready(softclip_pallas(x_big))
    assert jnp.allclose(out_big, softclip_ref(x_big), atol=1e-5, rtol=1e-5), \
        "tiled/ragged mismatch"

    # Misaligned path (pad tail + trailing slice): total not a multiple of 128.
    x_odd = jax.random.normal(k3, (3, 5, 7, 11), dtype=jnp.float32) * 10.0
    out_odd = jax.block_until_ready(softclip_pallas(x_odd))
    assert out_odd.shape == x_odd.shape and out_odd.dtype == x_odd.dtype
    assert jnp.allclose(out_odd, softclip_ref(x_odd), atol=1e-5, rtol=1e-5), \
        "padded mismatch"

    # bf16 input: f32 compute inside the kernel, cast back on store.
    x_bf = (jax.random.normal(k4, (2, 4, 16, 16), dtype=jnp.float32) * 10.0
            ).astype(jnp.bfloat16)
    out_bf = jax.block_until_ready(softclip_pallas(x_bf))
    assert out_bf.dtype == jnp.bfloat16
    assert jnp.allclose(out_bf.astype(jnp.float32),
                        softclip_ref(x_bf).astype(jnp.float32),
                        atol=1e-1, rtol=1e-2), "bf16 mismatch"

    print("KERNEL_OK")
</pallas_src>

<mosaic_0001>
module attributes {stable_mosaic.version = 11 : i64} {
  func.func @_softclip_kernel_fused(%arg0: i32, %arg1: memref<2x1024xf32, #tpu.memory_space<vmem>>, %arg2: memref<2x1024xf32, #tpu.memory_space<vmem>>) attributes {dimension_semantics = [#tpu.dimension_semantics<parallel>], iteration_bounds = array<i64: 1>, scalar_prefetch = 0 : i64, scratch_operands = 0 : i64, tpu.core_type = #tpu.core_type<tc>, window_params = [{transform_indices = @transform_0, window_bounds = array<i64: 2, 1024>}, {transform_indices = @transform_1, window_bounds = array<i64: 2, 1024>}]} {
    %c0 = arith.constant 0 : index
    %c0_0 = arith.constant 0 : index
    %0 = vector.load %arg1[%c0, %c0_0] : memref<2x1024xf32, #tpu.memory_space<vmem>>, vector<2x1024xf32>
    %cst = arith.constant -6.000000e+00 : f32
    %1 = vector.broadcast %cst : f32 to vector<2x1024xf32>
    %2 = arith.subf %0, %1 : vector<2x1024xf32>
    %3 = math.absf %2 : vector<2x1024xf32>
    %cst_1 = arith.constant 0.000000e+00 : f32
    %4 = vector.broadcast %cst_1 : f32 to vector<2x1024xf32>
    %5 = arith.subf %4, %3 : vector<2x1024xf32>
    %6 = math.exp %5 : vector<2x1024xf32>
    %7 = math.log1p %6 : vector<2x1024xf32>
    %cst_2 = arith.constant 0.000000e+00 : f32
    %8 = vector.broadcast %cst_2 : f32 to vector<2x1024xf32>
    %9 = arith.cmpf oge, %2, %8 : vector<2x1024xf32>
    %cst_3 = arith.constant 1.000000e+00 : f32
    %10 = vector.broadcast %cst_3 : f32 to vector<2x1024xf32>
    %11 = arith.select %9, %6, %10 : vector<2x1024xi1>, vector<2x1024xf32>
    %cst_4 = arith.constant 162754.797 : f32
    %12 = vector.broadcast %cst_4 : f32 to vector<2x1024xf32>
    %13 = arith.mulf %12, %11 : vector<2x1024xf32>
    %14 = arith.addf %6, %13 : vector<2x1024xf32>
    %15 = math.log1p %14 : vector<2x1024xf32>
    %16 = arith.subf %15, %7 : vector<2x1024xf32>
    %cst_5 = arith.constant 6.000000e+00 : f32
    %17 = vector.broadcast %cst_5 : f32 to vector<2x1024xf32>
    %18 = arith.subf %17, %16 : vector<2x1024xf32>
    %c0_6 = arith.constant 0 : index
    %c0_7 = arith.constant 0 : index
    %19 = vector.load %arg2[%c0_6, %c0_7] : memref<2x1024xf32, #tpu.memory_space<vmem>>, vector<2x1024xf32>
    tpu.vector_store %arg2[%c0_6, %c0_7], %18 {strides = array<i32>} : memref<2x1024xf32, #tpu.memory_space<vmem>>, vector<2x1024xf32>,
    return
  }
  func.func @transform_0(%arg0: i32) -> (i32, i32) {
    %c0_i32 = arith.constant 0 : i32
    %c0_i32_0 = arith.constant 0 : i32
    return %arg0, %c0_i32 : i32, i32
  }
  func.func @transform_1(%arg0: i32) -> (i32, i32) {
    %c0_i32 = arith.constant 0 : i32
    %c0_i32_0 = arith.constant 0 : i32
    return %arg0, %c0_i32 : i32, i32
  }
}

</mosaic_0001>

<llo_original>
// kernel: tpu_custom_call.1
$region0: #{tpu_custom_call.1}
  #allocation0 [shape = 'u32[]', space=smem, size = 0x4, offset = 0x4, fixed_abs, tag = 'smem constant byte address 0x4 - core index']
  #allocation1 [shape = 'u32[144,128]{1,0:T(1,128)}', space=vmem, size = 0x12000, scoped, tag = 'internal scratch']
  %s0 = inlined_call_operand.hbm [shape: f32[2,1024], index: 0, kind: input, shape index: {}]
  %s1 = inlined_call_operand.hbm [shape: f32[2,1024], index: 1, kind: output, shape index: {}]
  %s2 = sld [smem:[#allocation0]]
  $region18: #{tpu_custom_call.1} parent=0
    _
  %s4 = ssub.s32 1, %s2
  %s5 = scalar_select 0, %s4, %s2
  $region1: #{tpu_custom_call.1} parent=0
    #allocation2 [shape = 'u8[8192]{0}', space=vmem, size = 0x2000, scoped, tag = 'input window, operand 0, single buffered']
    #allocation3 [shape = 's32[1]{0}', space=sflag, size = 0x4, scoped, tag = 'scoped memory for tpu_custom_call.1']
    #allocation4 [shape = 's32[1]{0}', space=sflag, size = 0x4, scoped, tag = 'scoped memory for tpu_custom_call.1']
    #allocation5 [shape = 'u8[8192]{0}', space=vmem, size = 0x2000, scoped, tag = 'output window, operand 0, single buffered']
    %6 = vsyncpa [#allocation3], 0
    %7 = vsyncpa [#allocation4], 0
    // Predicated region
    $region2: #{tpu_custom_call.1} parent=1 // pred_check
      _
    $region3: #{tpu_custom_call.1} parent=1 // pred_check_branch
      %9 = sbr.rel (0) target = $region5
    $region4: #{tpu_custom_call.1} parent=1 // pred_region
      %s11 = ssub.s32 256, 256
      %12 = vsyncadd [#allocation3], %s11
      %s14 = sshll.u32 [#allocation2], 4
      %s15 = int_to_ptr.vmem [resolvable:$true] %s14
      %17 = dma.hbm_to_vmem [thread:$0]  %s0, 256, %s15, [#allocation3]
    $region5: #{tpu_custom_call.1} parent=1 // pred_fallthru
      _
    // Predicated region
    $region6: #{tpu_custom_call.1} parent=1 // pred_check
      _
    $region7: #{tpu_custom_call.1} parent=1 // pred_check_branch
      %19 = sbr.rel (0) target = $region9
    $region8: #{tpu_custom_call.1} parent=1 // pred_region
      %20 = dma.done [#allocation3], 256
    $region9: #{tpu_custom_call.1} parent=1 // pred_fallthru
      _
    %v21 = vld [vmem:[#allocation2] sm:$0xff]
    %v22 = vld [vmem:[#allocation2 + $0x8] sm:$0xff]
    %v23 = vsub.f32 %v21, -6.0
    %v24 = vsub.f32 %v22, -6.0
    %v25 = vand.u32 2147483647, %v23
    %v26 = vand.u32 2147483647, %v24
    %v27 = vsub.f32 0.0, %v25
    %v28 = vsub.f32 0.0, %v26
    %v29 = vmul.f32 %v27, 1.442695
    %v30 = vpow.pop %v29
    %v31 = vmul.f32 %v28, 1.442695
    %v32 = vpow.pop %v31
    %v33 = vadd.f32 %v30, 1.0
    %v34 = vlog2.pop %v33
    %v35 = vmul.f32 %v34, 0.6931472
    %v36 = vmul.f32 -0.5, %v30
    %v37 = vadd.f32 %v36, 1.0
    %v38 = vmul.f32 %v37, %v30
    %v39 = vand.u32 2147483647, %v30
    %vm40 = vcmp.lt.f32.partialorder %v39, 0.0004427343
    %v41 = vsel %vm40, %v38, %v35
    %v42 = vadd.f32 %v32, 1.0
    %v43 = vlog2.pop %v42
    %v44 = vmul.f32 %v43, 0.6931472
    %v45 = vmul.f32 -0.5, %v32
    %v46 = vadd.f32 %v45, 1.0
    %v47 = vmul.f32 %v46, %v32
    %v48 = vand.u32 2147483647, %v32
    %vm49 = vcmp.lt.f32.partialorder %v48, 0.0004427343
    %v50 = vsel %vm49, %v47, %v44
    %vm51 = vcmp.ge.f32.partialorder %v23, 0.0
    %vm52 = vcmp.ge.f32.partialorder %v24, 0.0
    %v53 = vsel %vm51, %v30, 1.0
    %v54 = vsel %vm52, %v32, 1.0
    %v55 = vmul.f32 %v53, 162754.8
    %v56 = vmul.f32 %v54, 162754.8
    %v57 = vadd.f32 %v30, %v55
    %v58 = vadd.f32 %v32, %v56
    %v59 = vadd.f32 %v57, 1.0
    %v60 = vlog2.pop %v59
    %v61 = vmul.f32 %v60, 0.6931472
    %v62 = vmul.f32 -0.5, %v57
    %v63 = vadd.f32 %v62, 1.0
    %v64 = vmul.f32 %v63, %v57
    %v65 = vand.u32 2147483647, %v57
    %vm66 = vcmp.lt.f32.partialorder %v65, 0.0004427343
    %v67 = vsel %vm66, %v64, %v61
    %v68 = vadd.f32 %v58, 1.0
    %v69 = vlog2.pop %v68
    %v70 = vmul.f32 %v69, 0.6931472
    %v71 = vmul.f32 -0.5, %v58
    %v72 = vadd.f32 %v71, 1.0
    %v73 = vmul.f32 %v72, %v58
    %v74 = vand.u32 2147483647, %v58
    %vm75 = vcmp.lt.f32.partialorder %v74, 0.0004427343
    %v76 = vsel %vm75, %v73, %v70
    %v77 = vsub.f32 %v67, %v41
    %v78 = vsub.f32 %v76, %v50
    %v79 = vsub.f32 6.0, %v77
    %v80 = vsub.f32 6.0, %v78
    %81 = vst [vmem:[#allocation5] sm:$0xff] %v79
    %82 = vst [vmem:[#allocation5 + $0x8] sm:$0xff] %v80
    // Predicated region
    $region10: #{tpu_custom_call.1} parent=1 // pred_check
      _
    $region11: #{tpu_custom_call.1} parent=1 // pred_check_branch
      %84 = sbr.rel (0) target = $region13
    $region12: #{tpu_custom_call.1} parent=1 // pred_region
      %s86 = ssub.s32 256, 256
      %87 = vsyncadd [#allocation4], %s86
      %s89 = sshll.u32 [#allocation5], 4
      %s90 = int_to_ptr.vmem [resolvable:$true] %s89
      %92 = dma.vmem_to_hbm [thread:$0]  %s90, 256, %s1, [#allocation4]
    $region13: #{tpu_custom_call.1} parent=1 // pred_fallthru
      _
    // Predicated region
    $region14: #{tpu_custom_call.1} parent=1 // pred_check
      _
    $region15: #{tpu_custom_call.1} parent=1 // pred_check_branch
      %94 = sbr.rel (0) target = $region17
    $region16: #{tpu_custom_call.1} parent=1 // pred_region
      %95 = dma.done [#allocation4], 256
    $region17: #{tpu_custom_call.1} parent=1 // pred_fallthru
      _
    %96 = vsyncpa [#allocation3], 1
    %97 = vsyncpa [#allocation4], 1

</llo_original>
